<compile_context>
chip_gen: v7x
topology: tpu7x:2x2x1
jax: 0.10.0
libtpu: 0.0.40
codegen_flags: <defaults>
</compile_context>

<pallas_src>
import jax
import jax.numpy as jnp
from jax.experimental import pallas as pl
from jax.experimental.pallas import tpu as pltpu


def _round_up(n, m):
    return ((n + m - 1) // m) * m


def _make_dqn_kernel(chunk, n_chunks):
    """Builds the fused 4-layer MLP kernel for one (feat, TB) batch tile."""

    def kernel(x_ref, w1_ref, b1_ref, w2_ref, b2_ref,
               w3_ref, b3_ref, w4_ref, b4_ref, o_ref):
        # Tiny parameters: load once per grid step, live in vregs.
        w1, b1 = w1_ref[...], b1_ref[...]
        w2, b2 = w2_ref[...], b2_ref[...]
        w3, b3 = w3_ref[...], b3_ref[...]
        w4, b4 = w4_ref[...], b4_ref[...]

        def compute_chunk(c, carry):
            col = pl.multiple_of(c * chunk, 128)
            xT = x_ref[:, pl.ds(col, chunk)]                      # (in, chunk)
            h = jnp.dot(w1, xT, preferred_element_type=jnp.float32) + b1
            h = jnp.maximum(h, 0.0)
            h = jnp.dot(w2, h, preferred_element_type=jnp.float32) + b2
            h = jnp.maximum(h, 0.0)
            h = jnp.dot(w3, h, preferred_element_type=jnp.float32) + b3
            h = jnp.maximum(h, 0.0)
            out = jnp.dot(w4, h, preferred_element_type=jnp.float32) + b4
            o_ref[:, pl.ds(col, chunk)] = out.astype(o_ref.dtype)  # lane-dense
            return carry

        if n_chunks == 1:
            compute_chunk(0, None)
        else:
            # Bounded unroll keeps code size in check at TB up to 64K while
            # still giving the LLO scheduler visibility across chunk bodies.
            jax.lax.fori_loop(0, n_chunks, compute_chunk, None,
                              unroll=min(n_chunks, 8))

    return kernel


def dqn_forward_fm(xT, params, *, block_b=65536, chunk=512):
    """Feature-major forward: xT (in_size, B) f32 -> (out_size, B) f32.

    params: w1..w4 in PyTorch layout (out_features, in_features),
            b1..b4 as (out_features, 1).
    """
    in_size, B = xT.shape
    out_size = params["w4"].shape[0]

    # --- batch tile (lane axis) selection ------------------------------------
    if B <= chunk:
        TB = _round_up(B, 128)                 # single small tile, one chunk
        C = TB
    else:
        C = chunk
        TB = min(_round_up(B, C), _round_up(block_b, C))
        # Keep >= 2 grid steps when the batch is big enough so that v7x's two
        # TensorCores both get work on the "parallel" batch axis.
        if TB >= B and B > 2 * C:
            TB = _round_up(pl.cdiv(B, 2), C)
    n_chunks = TB // C
    grid = (pl.cdiv(B, TB),)                   # ragged last tile: no jnp.pad

    # --- specs ----------------------------------------------------------------
    def resident(p):
        # Full-array block, constant index_map -> stays in VMEM across steps.
        return pl.BlockSpec(p.shape, lambda i: (0, 0))

    in_specs = [
        pl.BlockSpec((in_size, TB), lambda i: (0, i)),   # x^T: pipelined
        resident(params["w1"]), resident(params["b1"]),
        resident(params["w2"]), resident(params["b2"]),
        resident(params["w3"]), resident(params["b3"]),
        resident(params["w4"]), resident(params["b4"]),
    ]
    out_spec = pl.BlockSpec((out_size, TB), lambda i: (0, i))

    # Only the (double-buffered) x / out tiles scale with TB; activations stay
    # in vregs thanks to the in-kernel chunk loop.
    param_bytes = sum(int(p.size) * p.dtype.itemsize for p in params.values())
    need = 2 * 4 * TB * (in_size + out_size) + 2 * param_bytes + (4 << 20)
    vmem_limit = min(max(need, 32 << 20), 64 << 20)

    return pl.pallas_call(
        _make_dqn_kernel(C, n_chunks),
        out_shape=jax.ShapeDtypeStruct((out_size, B), jnp.float32),
        grid=grid,
        in_specs=in_specs,
        out_specs=out_spec,
        compiler_params=pltpu.CompilerParams(
            dimension_semantics=("parallel",),
            vmem_limit_bytes=vmem_limit),
    )(xT,
      params["w1"], params["b1"],
      params["w2"], params["b2"],
      params["w3"], params["b3"],
      params["w4"], params["b4"])


def dqn_forward(x, params, **kwargs):
    """PyTorch-layout compatibility shim: x (B, in_size) -> (B, out_size).

    Prefer `dqn_forward_fm` (feature-major I/O) to avoid the two transpose
    passes this adds around an otherwise memory-bound kernel.
    """
    return dqn_forward_fm(x.T, params, **kwargs).T


def init_params(key, input_size, output_size):
    """Deterministic init mimicking nn.Linear's uniform(-1/sqrt(fan_in), ...).

    Weights in PyTorch layout (out_features, in_features); biases (out, 1).
    """
    sizes = [(input_size, 12), (12, 24), (24, 12), (12, output_size)]
    params = {}
    for i, (fan_in, fan_out) in enumerate(sizes, start=1):
        key, kw, kb = jax.random.split(key, 3)
        bound = 1.0 / jnp.sqrt(jnp.float32(fan_in))
        params[f"w{i}"] = jax.random.uniform(
            kw, (fan_out, fan_in), jnp.float32, minval=-bound, maxval=bound)
        params[f"b{i}"] = jax.random.uniform(
            kb, (fan_out, 1), jnp.float32, minval=-bound, maxval=bound)
    return params


def reference_forward(x, params):
    h = jnp.maximum(x @ params["w1"].T + params["b1"].T, 0.0)
    h = jnp.maximum(h @ params["w2"].T + params["b2"].T, 0.0)
    h = jnp.maximum(h @ params["w3"].T + params["b3"].T, 0.0)
    return h @ params["w4"].T + params["b4"].T


if __name__ == "__main__":
    key = jax.random.PRNGKey(0)
    input_size, output_size = 4, 2

    kx, kp, kx2 = jax.random.split(key, 3)
    params = init_params(kp, input_size, output_size)

    # 1) PyTorch-layout API, tiny batch.
    batch = 8
    x = jax.random.normal(kx, (batch, input_size), jnp.float32)
    out = jax.block_until_ready(dqn_forward(x, params))
    ref = reference_forward(x, params)
    assert out.shape == (batch, output_size)
    assert jnp.allclose(out, ref, atol=1e-5, rtol=1e-5)

    # 2) Feature-major fast path, ragged (non-128-multiple) batch.
    batch2 = 200
    xT2 = jax.random.normal(kx2, (input_size, batch2), jnp.float32)
    outT2 = jax.block_until_ready(dqn_forward_fm(xT2, params))
    ref2 = reference_forward(xT2.T, params)
    assert outT2.shape == (output_size, batch2)
    assert jnp.allclose(outT2.T, ref2, atol=1e-5, rtol=1e-5)

    print("KERNEL_OK")
</pallas_src>

<mosaic_0001>
module attributes {stable_mosaic.version = 11 : i64} {
  func.func @kernel(%arg0: i32, %arg1: memref<4x128xf32, #tpu.memory_space<vmem>>, %arg2: memref<12x4xf32, #tpu.memory_space<vmem>>, %arg3: memref<12x1xf32, #tpu.memory_space<vmem>>, %arg4: memref<24x12xf32, #tpu.memory_space<vmem>>, %arg5: memref<24x1xf32, #tpu.memory_space<vmem>>, %arg6: memref<12x24xf32, #tpu.memory_space<vmem>>, %arg7: memref<12x1xf32, #tpu.memory_space<vmem>>, %arg8: memref<2x12xf32, #tpu.memory_space<vmem>>, %arg9: memref<2x1xf32, #tpu.memory_space<vmem>>, %arg10: memref<2x128xf32, #tpu.memory_space<vmem>>) attributes {dimension_semantics = [#tpu.dimension_semantics<parallel>], iteration_bounds = array<i64: 1>, scalar_prefetch = 0 : i64, scratch_operands = 0 : i64, tpu.core_type = #tpu.core_type<tc>, window_params = [{transform_indices = @transform_0, window_bounds = array<i64: 4, 128>}, {pipeline_mode = #tpu.pipeline_mode<synchronous>, transform_indices = @transform_1, window_bounds = array<i64: 12, 4>}, {pipeline_mode = #tpu.pipeline_mode<synchronous>, transform_indices = @transform_2, window_bounds = array<i64: 12, 1>}, {pipeline_mode = #tpu.pipeline_mode<synchronous>, transform_indices = @transform_3, window_bounds = array<i64: 24, 12>}, {pipeline_mode = #tpu.pipeline_mode<synchronous>, transform_indices = @transform_4, window_bounds = array<i64: 24, 1>}, {pipeline_mode = #tpu.pipeline_mode<synchronous>, transform_indices = @transform_5, window_bounds = array<i64: 12, 24>}, {pipeline_mode = #tpu.pipeline_mode<synchronous>, transform_indices = @transform_6, window_bounds = array<i64: 12, 1>}, {pipeline_mode = #tpu.pipeline_mode<synchronous>, transform_indices = @transform_7, window_bounds = array<i64: 2, 12>}, {pipeline_mode = #tpu.pipeline_mode<synchronous>, transform_indices = @transform_8, window_bounds = array<i64: 2, 1>}, {transform_indices = @transform_9, window_bounds = array<i64: 2, 128>}]} {
    %c0 = arith.constant 0 : index
    %c0_0 = arith.constant 0 : index
    %0 = vector.load %arg2[%c0, %c0_0] : memref<12x4xf32, #tpu.memory_space<vmem>>, vector<12x4xf32>
    %c0_1 = arith.constant 0 : index
    %c0_2 = arith.constant 0 : index
    %1 = vector.load %arg3[%c0_1, %c0_2] : memref<12x1xf32, #tpu.memory_space<vmem>>, vector<12x1xf32>
    %c0_3 = arith.constant 0 : index
    %c0_4 = arith.constant 0 : index
    %2 = vector.load %arg4[%c0_3, %c0_4] : memref<24x12xf32, #tpu.memory_space<vmem>>, vector<24x12xf32>
    %c0_5 = arith.constant 0 : index
    %c0_6 = arith.constant 0 : index
    %3 = vector.load %arg5[%c0_5, %c0_6] : memref<24x1xf32, #tpu.memory_space<vmem>>, vector<24x1xf32>
    %c0_7 = arith.constant 0 : index
    %c0_8 = arith.constant 0 : index
    %4 = vector.load %arg6[%c0_7, %c0_8] : memref<12x24xf32, #tpu.memory_space<vmem>>, vector<12x24xf32>
    %c0_9 = arith.constant 0 : index
    %c0_10 = arith.constant 0 : index
    %5 = vector.load %arg7[%c0_9, %c0_10] : memref<12x1xf32, #tpu.memory_space<vmem>>, vector<12x1xf32>
    %c0_11 = arith.constant 0 : index
    %c0_12 = arith.constant 0 : index
    %6 = vector.load %arg8[%c0_11, %c0_12] : memref<2x12xf32, #tpu.memory_space<vmem>>, vector<2x12xf32>
    %c0_13 = arith.constant 0 : index
    %c0_14 = arith.constant 0 : index
    %7 = vector.load %arg9[%c0_13, %c0_14] : memref<2x1xf32, #tpu.memory_space<vmem>>, vector<2x1xf32>
    %c0_i32 = arith.constant 0 : i32
    %8 = tpu.assume_multiple %c0_i32, 128 : i32
    %c0_15 = arith.constant 0 : index
    %9 = arith.index_cast %8 : i32 to index
    %10 = vector.load %arg1[%c0_15, %9] : memref<4x128xf32, #tpu.memory_space<vmem>>, vector<4x128xf32>
    %cst = arith.constant dense<0.000000e+00> : vector<12x128xf32>
    %11 = tpu.matmul %0, %10, %cst {dimension_numbers = #tpu.dot_dimension_numbers<[1], [0], [0], [1], [0, 0, 1, 1], [], []>} : vector<12x4xf32>, vector<4x128xf32>, vector<12x128xf32> -> vector<12x128xf32>
    %12 = vector.broadcast %1 : vector<12x1xf32> to vector<12x128xf32>
    %13 = arith.addf %11, %12 : vector<12x128xf32>
    %cst_16 = arith.constant 0.000000e+00 : f32
    %14 = vector.broadcast %cst_16 : f32 to vector<12x128xf32>
    %15 = arith.maximumf %13, %14 : vector<12x128xf32>
    %cst_17 = arith.constant dense<0.000000e+00> : vector<24x128xf32>
    %16 = tpu.matmul %2, %15, %cst_17 {dimension_numbers = #tpu.dot_dimension_numbers<[1], [0], [0], [1], [0, 0, 1, 1], [], []>} : vector<24x12xf32>, vector<12x128xf32>, vector<24x128xf32> -> vector<24x128xf32>
    %17 = vector.broadcast %3 : vector<24x1xf32> to vector<24x128xf32>
    %18 = arith.addf %16, %17 : vector<24x128xf32>
    %cst_18 = arith.constant 0.000000e+00 : f32
    %19 = vector.broadcast %cst_18 : f32 to vector<24x128xf32>
    %20 = arith.maximumf %18, %19 : vector<24x128xf32>
    %cst_19 = arith.constant dense<0.000000e+00> : vector<12x128xf32>
    %21 = tpu.matmul %4, %20, %cst_19 {dimension_numbers = #tpu.dot_dimension_numbers<[1], [0], [0], [1], [0, 0, 1, 1], [], []>} : vector<12x24xf32>, vector<24x128xf32>, vector<12x128xf32> -> vector<12x128xf32>
    %22 = vector.broadcast %5 : vector<12x1xf32> to vector<12x128xf32>
    %23 = arith.addf %21, %22 : vector<12x128xf32>
    %cst_20 = arith.constant 0.000000e+00 : f32
    %24 = vector.broadcast %cst_20 : f32 to vector<12x128xf32>
    %25 = arith.maximumf %23, %24 : vector<12x128xf32>
    %cst_21 = arith.constant dense<0.000000e+00> : vector<2x128xf32>
    %26 = tpu.matmul %6, %25, %cst_21 {dimension_numbers = #tpu.dot_dimension_numbers<[1], [0], [0], [1], [0, 0, 1, 1], [], []>} : vector<2x12xf32>, vector<12x128xf32>, vector<2x128xf32> -> vector<2x128xf32>
    %27 = vector.broadcast %7 : vector<2x1xf32> to vector<2x128xf32>
    %28 = arith.addf %26, %27 : vector<2x128xf32>
    %c0_22 = arith.constant 0 : index
    %29 = arith.index_cast %8 : i32 to index
    %30 = vector.load %arg10[%c0_22, %29] : memref<2x128xf32, #tpu.memory_space<vmem>>, vector<2x128xf32>
    tpu.vector_store %arg10[%c0_22, %29], %28 {strides = array<i32>} : memref<2x128xf32, #tpu.memory_space<vmem>>, vector<2x128xf32>,
    return
  }
  func.func @transform_0(%arg0: i32) -> (i32, i32) {
    %c0_i32 = arith.constant 0 : i32
    %c0_i32_0 = arith.constant 0 : i32
    return %c0_i32, %arg0 : i32, i32
  }
  func.func @transform_1(%arg0: i32) -> (i32, i32) {
    %c0_i32 = arith.constant 0 : i32
    %c0_i32_0 = arith.constant 0 : i32
    %c0_i32_1 = arith.constant 0 : i32
    return %c0_i32, %c0_i32_0 : i32, i32
  }
  func.func @transform_2(%arg0: i32) -> (i32, i32) {
    %c0_i32 = arith.constant 0 : i32
    %c0_i32_0 = arith.constant 0 : i32
    %c0_i32_1 = arith.constant 0 : i32
    return %c0_i32, %c0_i32_0 : i32, i32
  }
  func.func @transform_3(%arg0: i32) -> (i32, i32) {
    %c0_i32 = arith.constant 0 : i32
    %c0_i32_0 = arith.constant 0 : i32
    %c0_i32_1 = arith.constant 0 : i32
    return %c0_i32, %c0_i32_0 : i32, i32
  }
  func.func @transform_4(%arg0: i32) -> (i32, i32) {
    %c0_i32 = arith.constant 0 : i32
    %c0_i32_0 = arith.constant 0 : i32
    %c0_i32_1 = arith.constant 0 : i32
    return %c0_i32, %c0_i32_0 : i32, i32
  }
  func.func @transform_5(%arg0: i32) -> (i32, i32) {
    %c0_i32 = arith.constant 0 : i32
    %c0_i32_0 = arith.constant 0 : i32
    %c0_i32_1 = arith.constant 0 : i32
    return %c0_i32, %c0_i32_0 : i32, i32
  }
  func.func @transform_6(%arg0: i32) -> (i32, i32) {
    %c0_i32 = arith.constant 0 : i32
    %c0_i32_0 = arith.constant 0 : i32
    %c0_i32_1 = arith.constant 0 : i32
    return %c0_i32, %c0_i32_0 : i32, i32
  }
  func.func @transform_7(%arg0: i32) -> (i32, i32) {
    %c0_i32 = arith.constant 0 : i32
    %c0_i32_0 = arith.constant 0 : i32
    %c0_i32_1 = arith.constant 0 : i32
    return %c0_i32, %c0_i32_0 : i32, i32
  }
  func.func @transform_8(%arg0: i32) -> (i32, i32) {
    %c0_i32 = arith.constant 0 : i32
    %c0_i32_0 = arith.constant 0 : i32
    %c0_i32_1 = arith.constant 0 : i32
    return %c0_i32, %c0_i32_0 : i32, i32
  }
  func.func @transform_9(%arg0: i32) -> (i32, i32) {
    %c0_i32 = arith.constant 0 : i32
    %c0_i32_0 = arith.constant 0 : i32
    return %c0_i32, %arg0 : i32, i32
  }
}

</mosaic_0001>

<llo_original>
// kernel: tpu_custom_call.1
$region0: #{tpu_custom_call.1}
  #allocation0 [shape = 'u32[]', space=smem, size = 0x4, offset = 0x4, fixed_abs, tag = 'smem constant byte address 0x4 - core index']
  #allocation1 [shape = 'u32[144,128]{1,0:T(1,128)}', space=vmem, size = 0x12000, scoped, tag = 'internal scratch']
  %s0 = inlined_call_operand.vmem [shape: f32[4,8], index: 0, kind: input, shape index: {}]
  %s1 = inlined_call_operand.vmem [shape: f32[12,4], index: 1, kind: input, shape index: {}]
  %s2 = inlined_call_operand.vmem [shape: f32[12,1], index: 2, kind: input, shape index: {}]
  %s3 = inlined_call_operand.vmem [shape: f32[24,12], index: 3, kind: input, shape index: {}]
  %s4 = inlined_call_operand.vmem [shape: f32[24,1], index: 4, kind: input, shape index: {}]
  %s5 = inlined_call_operand.vmem [shape: f32[12,24], index: 5, kind: input, shape index: {}]
  %s6 = inlined_call_operand.vmem [shape: f32[12,1], index: 6, kind: input, shape index: {}]
  %s7 = inlined_call_operand.vmem [shape: f32[2,12], index: 7, kind: input, shape index: {}]
  %s8 = inlined_call_operand.vmem [shape: f32[2,1], index: 8, kind: input, shape index: {}]
  %s9 = inlined_call_operand.hbm [shape: f32[2,8], index: 9, kind: output, shape index: {}]
  %s10 = sld [smem:[#allocation0]]
  $region46: #{tpu_custom_call.1} parent=0
    _
  %s12 = ssub.s32 1, %s10
  %s13 = scalar_select 0, %s12, %s10
  $region1: #{tpu_custom_call.1} parent=0
    #allocation2 [shape = 'u8[1024]{0}', space=vmem, size = 0x400, scoped, tag = 'output window, operand 0, single buffered']
    #allocation3 [shape = 's32[1]{0}', space=sflag, size = 0x4, scoped, tag = 'scoped memory for tpu_custom_call.1']
    %14 = vsyncpa [#allocation3], 0
    // Predicated region
    $region2: #{tpu_custom_call.1} parent=1 // pred_check
      _
    $region3: #{tpu_custom_call.1} parent=1 // pred_check_branch
      %16 = sbr.rel (0) target = $region5
    $region4: #{tpu_custom_call.1} parent=1 // pred_region
      _
    $region5: #{tpu_custom_call.1} parent=1 // pred_fallthru
      _
    // Predicated region
    $region6: #{tpu_custom_call.1} parent=1 // pred_check
      _
    $region7: #{tpu_custom_call.1} parent=1 // pred_check_branch
      %18 = sbr.rel (0) target = $region9
    $region8: #{tpu_custom_call.1} parent=1 // pred_region
      _
    $region9: #{tpu_custom_call.1} parent=1 // pred_fallthru
      _
    // Predicated region
    $region10: #{tpu_custom_call.1} parent=1 // pred_check
      _
    $region11: #{tpu_custom_call.1} parent=1 // pred_check_branch
      %20 = sbr.rel (0) target = $region13
    $region12: #{tpu_custom_call.1} parent=1 // pred_region
      _
    $region13: #{tpu_custom_call.1} parent=1 // pred_fallthru
      _
    // Predicated region
    $region14: #{tpu_custom_call.1} parent=1 // pred_check
      _
    $region15: #{tpu_custom_call.1} parent=1 // pred_check_branch
      %22 = sbr.rel (0) target = $region17
    $region16: #{tpu_custom_call.1} parent=1 // pred_region
      _
    $region17: #{tpu_custom_call.1} parent=1 // pred_fallthru
      _
    // Predicated region
    $region18: #{tpu_custom_call.1} parent=1 // pred_check
      _
    $region19: #{tpu_custom_call.1} parent=1 // pred_check_branch
      %24 = sbr.rel (0) target = $region21
    $region20: #{tpu_custom_call.1} parent=1 // pred_region
      _
    $region21: #{tpu_custom_call.1} parent=1 // pred_fallthru
      _
    // Predicated region
    $region22: #{tpu_custom_call.1} parent=1 // pred_check
      _
    $region23: #{tpu_custom_call.1} parent=1 // pred_check_branch
      %26 = sbr.rel (0) target = $region25
    $region24: #{tpu_custom_call.1} parent=1 // pred_region
      _
    $region25: #{tpu_custom_call.1} parent=1 // pred_fallthru
      _
    // Predicated region
    $region26: #{tpu_custom_call.1} parent=1 // pred_check
      _
    $region27: #{tpu_custom_call.1} parent=1 // pred_check_branch
      %28 = sbr.rel (0) target = $region29
    $region28: #{tpu_custom_call.1} parent=1 // pred_region
      _
    $region29: #{tpu_custom_call.1} parent=1 // pred_fallthru
      _
    // Predicated region
    $region30: #{tpu_custom_call.1} parent=1 // pred_check
      _
    $region31: #{tpu_custom_call.1} parent=1 // pred_check_branch
      %30 = sbr.rel (0) target = $region33
    $region32: #{tpu_custom_call.1} parent=1 // pred_region
      _
    $region33: #{tpu_custom_call.1} parent=1 // pred_fallthru
      _
    // Predicated region
    $region34: #{tpu_custom_call.1} parent=1 // pred_check
      _
    $region35: #{tpu_custom_call.1} parent=1 // pred_check_branch
      %32 = sbr.rel (0) target = $region37
    $region36: #{tpu_custom_call.1} parent=1 // pred_region
      _
    $region37: #{tpu_custom_call.1} parent=1 // pred_fallthru
      _
    %v33 = vld [vmem:[%s1] sm:$0xff]
    %v34 = vld [vmem:[%s1 + $0x8] sm:$0xf]
    %v35 = vld [vmem:[%s2] sm:$0xff]
    %v36 = vld [vmem:[%s2 + $0x8] sm:$0xf]
    %v37 = vld [vmem:[%s3] sm:$0xff]
    %v38 = vld [vmem:[%s3 + $0x8] sm:$0xff]
    %v39 = vld [vmem:[%s3 + $0x10] sm:$0xff]
    %v40 = vld [vmem:[%s4] sm:$0xff]
    %v41 = vld [vmem:[%s4 + $0x8] sm:$0xff]
    %v42 = vld [vmem:[%s4 + $0x10] sm:$0xff]
    %v43 = vld [vmem:[%s5] sm:$0xff]
    %v44 = vld [vmem:[%s5 + $0x8] sm:$0xf]
    %v45 = vld [vmem:[%s6] sm:$0xff]
    %v46 = vld [vmem:[%s6 + $0x8] sm:$0xf]
    %v47 = vld [vmem:[%s7] sm:$0x3]
    %v48 = vld [vmem:[%s8] sm:$0x3]
    %v49 = vld [vmem:[%s0] sm:$0xf]
    %51 = vset.pattern.permute.xlu0 0
    %52 = vperm.xlu0 %51, %v35
    %v53 = vpop.permute.xlu0 %52
    %56 = vset.pattern.permute.xlu0 0
    %57 = vperm.xlu0 %56, %v36
    %v58 = vpop.permute.xlu0 %57
    %vm60 = vcmask 31744
    %v62 = vsel %vm60, %v33, 0
    %v65 = vsel %vm60, %v34, 0
    %vm67 = vcmask 1043456
    %v69 = vsel %vm67, %v49, 0
    %71 = vmatprep.subr.mxu0 0.0
    %72 = vmatpush1.msra.mxu0 %v69
    %73 = vmatprep.subr.mxu0 0.0
    %74 = vmatpush1.msra.mxu0 0.0
    %75 = vmatprep.subr.mxu0 0.0
    %76 = vmatpush1.msra.mxu0 0.0
    %77 = vmatprep.subr.mxu0 0.0
    %78 = vmatpush1.msra.mxu0 0.0
    %79 = vmatprep.subr.mxu0 0.0
    %80 = vmatpush1.msra.mxu0 0.0
    %81 = vmatprep.subr.mxu0 0.0
    %82 = vmatpush1.msra.mxu0 0.0
    %83 = vmatprep.subr.mxu0 0.0
    %84 = vmatpush1.msra.mxu0 0.0
    %85 = vmatprep.subr.mxu0 0.0
    %86 = vmatpush1.msra.mxu0 0.0
    %87 = vmatprep.subr.mxu0 0.0
    %88 = vmatpush1.msra.mxu0 0.0
    %89 = vmatprep.subr.mxu0 0.0
    %90 = vmatpush1.msra.mxu0 0.0
    %91 = vmatprep.subr.mxu0 0.0
    %92 = vmatpush1.msra.mxu0 0.0
    %93 = vmatprep.subr.mxu0 0.0
    %94 = vmatpush1.msra.mxu0 0.0
    %95 = vmatprep.subr.mxu0 0.0
    %96 = vmatpush1.msra.mxu0 0.0
    %97 = vmatprep.subr.mxu0 0.0
    %98 = vmatpush1.msra.mxu0 0.0
    %99 = vmatprep.subr.mxu0 0.0
    %100 = vmatpush1.msra.mxu0 0.0
    %101 = vmatprep.subr.mxu0 0.0
    %102 = vmatpush1.msra.mxu0 0.0
    %103 = vmatprep.subr.mxu0 0.0
    %104 = vmatpush1.msra.mxu0 0.0
    %105 = vmatprep.subr.mxu0 0.0
    %106 = vmatpush1.msra.mxu0 0.0
    %107 = vmatprep.subr.mxu0 0.0
    %108 = vmatpush1.msra.mxu0 0.0
    %109 = vmatprep.subr.mxu0 0.0
    %110 = vmatpush1.msra.mxu0 0.0
    %111 = vmatprep.subr.mxu0 0.0
    %112 = vmatpush1.msra.mxu0 0.0
    %113 = vmatprep.subr.mxu0 0.0
    %114 = vmatpush1.msra.mxu0 0.0
    %115 = vmatprep.subr.mxu0 0.0
    %116 = vmatpush1.msra.mxu0 0.0
    %117 = vmatprep.subr.mxu0 0.0
    %118 = vmatpush1.msra.mxu0 0.0
    %119 = vmatprep.subr.mxu0 0.0
    %120 = vmatpush1.msra.mxu0 0.0
    %121 = vmatprep.subr.mxu0 0.0
    %122 = vmatpush1.msra.mxu0 0.0
    %123 = vmatprep.subr.mxu0 0.0
    %124 = vmatpush1.msra.mxu0 0.0
    %125 = vmatprep.subr.mxu0 0.0
    %126 = vmatpush1.msra.mxu0 0.0
    %127 = vmatprep.subr.mxu0 0.0
    %128 = vmatpush1.msra.mxu0 0.0
    %129 = vmatprep.subr.mxu0 0.0
    %130 = vmatpush1.msra.mxu0 0.0
    %131 = vmatprep.subr.mxu0 0.0
    %132 = vmatpush1.msra.mxu0 0.0
    %133 = vmatprep.subr.mxu0 0.0
    %134 = vmatpush1.msra.mxu0 0.0
    %135 = vmatprep.mubr.f32.mxu0 0.0
    %136 = vmatmul.mubr.f32.gmra.mrb[0].mxu0 %v62
    %v137 = vpop.f32.mrb[0].mxu0
    %v138 = vadd.f32 %v53, %v137
    %v139 = vpop.f32.mrb[0].mxu0
    %140 = vmatprep.mubr.f32.mxu0 0.0
    %141 = vmatmul.mubr.f32.gmra.mrb[0].mxu0 %v65
    %v142 = vpop.f32.mrb[0].mxu0
    %v143 = vadd.f32 %v58, %v142
    %v144 = vpop.f32.mrb[0].mxu0
    %145 = vdwg.mxu0
    %v146 = vmax.f32 %v138, 0.0
    %v147 = vmax.f32 %v143, 0.0
    %149 = vset.pattern.permute.xlu0 0
    %150 = vperm.xlu0 %149, %v40
    %v151 = vpop.permute.xlu0 %150
    %154 = vset.pattern.permute.xlu0 0
    %155 = vperm.xlu0 %154, %v41
    %v156 = vpop.permute.xlu0 %155
    %159 = vset.pattern.permute.xlu0 0
    %160 = vperm.xlu0 %159, %v42
    %v161 = vpop.permute.xlu0 %160
    %vm163 = vcmask 97280
    %v165 = vsel %vm163, %v37, 0
    %v168 = vsel %vm163, %v38, 0
    %v171 = vsel %vm163, %v39, 0
    %v174 = vsel %vm67, %v147, 0
    %176 = vmatprep.subr.mxu0 0.0
    %177 = vmatpush1.msra.mxu0 %v146
    %178 = vmatprep.subr.mxu0 0.0
    %179 = vmatpush1.msra.mxu0 %v174
    %180 = vmatprep.subr.mxu0 0.0
    %181 = vmatpush1.msra.mxu0 0.0
    %182 = vmatprep.subr.mxu0 0.0
    %183 = vmatpush1.msra.mxu0 0.0
    %184 = vmatprep.subr.mxu0 0.0
    %185 = vmatpush1.msra.mxu0 0.0
    %186 = vmatprep.subr.mxu0 0.0
    %187 = vmatpush1.msra.mxu0 0.0
    %188 = vmatprep.subr.mxu0 0.0
    %189 = vmatpush1.msra.mxu0 0.0
    %190 = vmatprep.subr.mxu0 0.0
    %191 = vmatpush1.msra.mxu0 0.0
    %192 = vmatprep.subr.mxu0 0.0
    %193 = vmatpush1.msra.mxu0 0.0
    %194 = vmatprep.subr.mxu0 0.0
    %195 = vmatpush1.msra.mxu0 0.0
    %196 = vmatprep.subr.mxu0 0.0
    %197 = vmatpush1.msra.mxu0 0.0
    %198 = vmatprep.subr.mxu0 0.0
    %199 = vmatpush1.msra.mxu0 0.0
    %200 = vmatprep.subr.mxu0 0.0
    %201 = vmatpush1.msra.mxu0 0.0
    %202 = vmatprep.subr.mxu0 0.0
    %203 = vmatpush1.msra.mxu0 0.0
    %204 = vmatprep.subr.mxu0 0.0
    %205 = vmatpush1.msra.mxu0 0.0
    %206 = vmatprep.subr.mxu0 0.0
    %207 = vmatpush1.msra.mxu0 0.0
    %208 = vmatprep.subr.mxu0 0.0
    %209 = vmatpush1.msra.mxu0 0.0
    %210 = vmatprep.subr.mxu0 0.0
    %211 = vmatpush1.msra.mxu0 0.0
    %212 = vmatprep.subr.mxu0 0.0
    %213 = vmatpush1.msra.mxu0 0.0
    %214 = vmatprep.subr.mxu0 0.0
    %215 = vmatpush1.msra.mxu0 0.0
    %216 = vmatprep.subr.mxu0 0.0
    %217 = vmatpush1.msra.mxu0 0.0
    %218 = vmatprep.subr.mxu0 0.0
    %219 = vmatpush1.msra.mxu0 0.0
    %220 = vmatprep.subr.mxu0 0.0
    %221 = vmatpush1.msra.mxu0 0.0
    %222 = vmatprep.subr.mxu0 0.0
    %223 = vmatpush1.msra.mxu0 0.0
    %224 = vmatprep.subr.mxu0 0.0
    %225 = vmatpush1.msra.mxu0 0.0
    %226 = vmatprep.subr.mxu0 0.0
    %227 = vmatpush1.msra.mxu0 0.0
    %228 = vmatprep.subr.mxu0 0.0
    %229 = vmatpush1.msra.mxu0 0.0
    %230 = vmatprep.subr.mxu0 0.0
    %231 = vmatpush1.msra.mxu0 0.0
    %232 = vmatprep.subr.mxu0 0.0
    %233 = vmatpush1.msra.mxu0 0.0
    %234 = vmatprep.subr.mxu0 0.0
    %235 = vmatpush1.msra.mxu0 0.0
    %236 = vmatprep.subr.mxu0 0.0
    %237 = vmatpush1.msra.mxu0 0.0
    %238 = vmatprep.subr.mxu0 0.0
    %239 = vmatpush1.msra.mxu0 0.0
    %240 = vmatprep.mubr.f32.mxu0 0.0
    %241 = vmatmul.mubr.f32.gmra.mrb[0].mxu0 %v165
    %v242 = vpop.f32.mrb[0].mxu0
    %v243 = vadd.f32 %v151, %v242
    %v244 = vpop.f32.mrb[0].mxu0
    %245 = vmatprep.mubr.f32.mxu0 0.0
    %246 = vmatmul.mubr.f32.gmra.mrb[0].mxu0 %v168
    %v247 = vpop.f32.mrb[0].mxu0
    %v248 = vadd.f32 %v156, %v247
    %v249 = vpop.f32.mrb[0].mxu0
    %250 = vmatprep.mubr.f32.mxu0 0.0
    %251 = vmatmul.mubr.f32.gmra.mrb[0].mxu0 %v171
    %v252 = vpop.f32.mrb[0].mxu0
    %v253 = vadd.f32 %v161, %v252
    %v254 = vpop.f32.mrb[0].mxu0
    %255 = vdwg.mxu0
    %v256 = vmax.f32 %v243, 0.0
    %v257 = vmax.f32 %v248, 0.0
    %v258 = vmax.f32 %v253, 0.0
    %260 = vset.pattern.permute.xlu0 0
    %261 = vperm.xlu0 %260, %v45
    %v262 = vpop.permute.xlu0 %261
    %265 = vset.pattern.permute.xlu0 0
    %266 = vperm.xlu0 %265, %v46
    %v267 = vpop.permute.xlu0 %266
    %vm269 = vcmask 195584
    %v271 = vsel %vm269, %v43, 0
    %v274 = vsel %vm269, %v44, 0
    %276 = vmatprep.subr.mxu0 0.0
    %277 = vmatpush1.msra.mxu0 %v256
    %278 = vmatprep.subr.mxu0 0.0
    %279 = vmatpush1.msra.mxu0 %v257
    %280 = vmatprep.subr.mxu0 0.0
    %281 = vmatpush1.msra.mxu0 %v258
    %282 = vmatprep.subr.mxu0 0.0
    %283 = vmatpush1.msra.mxu0 0.0
    %284 = vmatprep.subr.mxu0 0.0
    %285 = vmatpush1.msra.mxu0 0.0
    %286 = vmatprep.subr.mxu0 0.0
    %287 = vmatpush1.msra.mxu0 0.0
    %288 = vmatprep.subr.mxu0 0.0
    %289 = vmatpush1.msra.mxu0 0.0
    %290 = vmatprep.subr.mxu0 0.0
    %291 = vmatpush1.msra.mxu0 0.0
    %292 = vmatprep.subr.mxu0 0.0
    %293 = vmatpush1.msra.mxu0 0.0
    %294 = vmatprep.subr.mxu0 0.0
    %295 = vmatpush1.msra.mxu0 0.0
    %296 = vmatprep.subr.mxu0 0.0
    %297 = vmatpush1.msra.mxu0 0.0
    %298 = vmatprep.subr.mxu0 0.0
    %299 = vmatpush1.msra.mxu0 0.0
    %300 = vmatprep.subr.mxu0 0.0
    %301 = vmatpush1.msra.mxu0 0.0
    %302 = vmatprep.subr.mxu0 0.0
    %303 = vmatpush1.msra.mxu0 0.0
    %304 = vmatprep.subr.mxu0 0.0
    %305 = vmatpush1.msra.mxu0 0.0
    %306 = vmatprep.subr.mxu0 0.0
    %307 = vmatpush1.msra.mxu0 0.0
    %308 = vmatprep.subr.mxu0 0.0
    %309 = vmatpush1.msra.mxu0 0.0
    %310 = vmatprep.subr.mxu0 0.0
    %311 = vmatpush1.msra.mxu0 0.0
    %312 = vmatprep.subr.mxu0 0.0
    %313 = vmatpush1.msra.mxu0 0.0
    %314 = vmatprep.subr.mxu0 0.0
    %315 = vmatpush1.msra.mxu0 0.0
    %316 = vmatprep.subr.mxu0 0.0
    %317 = vmatpush1.msra.mxu0 0.0
    %318 = vmatprep.subr.mxu0 0.0
    %319 = vmatpush1.msra.mxu0 0.0
    %320 = vmatprep.subr.mxu0 0.0
    %321 = vmatpush1.msra.mxu0 0.0
    %322 = vmatprep.subr.mxu0 0.0
    %323 = vmatpush1.msra.mxu0 0.0
    %324 = vmatprep.subr.mxu0 0.0
    %325 = vmatpush1.msra.mxu0 0.0
    %326 = vmatprep.subr.mxu0 0.0
    %327 = vmatpush1.msra.mxu0 0.0
    %328 = vmatprep.subr.mxu0 0.0
    %329 = vmatpush1.msra.mxu0 0.0
    %330 = vmatprep.subr.mxu0 0.0
    %331 = vmatpush1.msra.mxu0 0.0
    %332 = vmatprep.subr.mxu0 0.0
    %333 = vmatpush1.msra.mxu0 0.0
    %334 = vmatprep.subr.mxu0 0.0
    %335 = vmatpush1.msra.mxu0 0.0
    %336 = vmatprep.subr.mxu0 0.0
    %337 = vmatpush1.msra.mxu0 0.0
    %338 = vmatprep.subr.mxu0 0.0
    %339 = vmatpush1.msra.mxu0 0.0
    %340 = vmatprep.mubr.f32.mxu0 0.0
    %341 = vmatmul.mubr.f32.gmra.mrb[0].mxu0 %v271
    %v342 = vpop.f32.mrb[0].mxu0
    %v343 = vadd.f32 %v262, %v342
    %v344 = vpop.f32.mrb[0].mxu0
    %345 = vmatprep.mubr.f32.mxu0 0.0
    %346 = vmatmul.mubr.f32.gmra.mrb[0].mxu0 %v274
    %v347 = vpop.f32.mrb[0].mxu0
    %v348 = vadd.f32 %v267, %v347
    %v349 = vpop.f32.mrb[0].mxu0
    %350 = vdwg.mxu0
    %v351 = vmax.f32 %v343, 0.0
    %v352 = vmax.f32 %v348, 0.0
    %354 = vset.pattern.permute.xlu0 0
    %355 = vperm.xlu0 %354, %v48
    %v356 = vpop.permute.xlu0 %355
    %v359 = vsel %vm163, %v47, 0
    %v362 = vsel %vm67, %v352, 0
    %364 = vmatprep.subr.mxu0 0.0
    %365 = vmatpush1.msra.mxu0 %v351
    %366 = vmatprep.subr.mxu0 0.0
    %367 = vmatpush1.msra.mxu0 %v362
    %368 = vmatprep.subr.mxu0 0.0
    %369 = vmatpush1.msra.mxu0 0.0
    %370 = vmatprep.subr.mxu0 0.0
    %371 = vmatpush1.msra.mxu0 0.0
    %372 = vmatprep.subr.mxu0 0.0
    %373 = vmatpush1.msra.mxu0 0.0
    %374 = vmatprep.subr.mxu0 0.0
    %375 = vmatpush1.msra.mxu0 0.0
    %376 = vmatprep.subr.mxu0 0.0
    %377 = vmatpush1.msra.mxu0 0.0
    %378 = vmatprep.subr.mxu0 0.0
    %379 = vmatpush1.msra.mxu0 0.0
    %380 = vmatprep.subr.mxu0 0.0
    %381 = vmatpush1.msra.mxu0 0.0
    %382 = vmatprep.subr.mxu0 0.0
    %383 = vmatpush1.msra.mxu0 0.0
    %384 = vmatprep.subr.mxu0 0.0
    %385 = vmatpush1.msra.mxu0 0.0
    %386 = vmatprep.subr.mxu0 0.0
    %387 = vmatpush1.msra.mxu0 0.0
    %388 = vmatprep.subr.mxu0 0.0
    %389 = vmatpush1.msra.mxu0 0.0
    %390 = vmatprep.subr.mxu0 0.0
    %391 = vmatpush1.msra.mxu0 0.0
    %392 = vmatprep.subr.mxu0 0.0
    %393 = vmatpush1.msra.mxu0 0.0
    %394 = vmatprep.subr.mxu0 0.0
    %395 = vmatpush1.msra.mxu0 0.0
    %396 = vmatprep.subr.mxu0 0.0
    %397 = vmatpush1.msra.mxu0 0.0
    %398 = vmatprep.subr.mxu0 0.0
    %399 = vmatpush1.msra.mxu0 0.0
    %400 = vmatprep.subr.mxu0 0.0
    %401 = vmatpush1.msra.mxu0 0.0
    %402 = vmatprep.subr.mxu0 0.0
    %403 = vmatpush1.msra.mxu0 0.0
    %404 = vmatprep.subr.mxu0 0.0
    %405 = vmatpush1.msra.mxu0 0.0
    %406 = vmatprep.subr.mxu0 0.0
    %407 = vmatpush1.msra.mxu0 0.0
    %408 = vmatprep.subr.mxu0 0.0
    %409 = vmatpush1.msra.mxu0 0.0
    %410 = vmatprep.subr.mxu0 0.0
    %411 = vmatpush1.msra.mxu0 0.0
    %412 = vmatprep.subr.mxu0 0.0
    %413 = vmatpush1.msra.mxu0 0.0
    %414 = vmatprep.subr.mxu0 0.0
    %415 = vmatpush1.msra.mxu0 0.0
    %416 = vmatprep.subr.mxu0 0.0
    %417 = vmatpush1.msra.mxu0 0.0
    %418 = vmatprep.subr.mxu0 0.0
    %419 = vmatpush1.msra.mxu0 0.0
    %420 = vmatprep.subr.mxu0 0.0
    %421 = vmatpush1.msra.mxu0 0.0
    %422 = vmatprep.subr.mxu0 0.0
    %423 = vmatpush1.msra.mxu0 0.0
    %424 = vmatprep.subr.mxu0 0.0
    %425 = vmatpush1.msra.mxu0 0.0
    %426 = vmatprep.subr.mxu0 0.0
    %427 = vmatpush1.msra.mxu0 0.0
    %428 = vmatprep.mubr.f32.mxu0 0.0
    %429 = vmatmul.mubr.f32.gmra.mrb[0].mxu0 %v359
    %v430 = vpop.f32.mrb[0].mxu0
    %v431 = vadd.f32 %v356, %v430
    %v432 = vpop.f32.mrb[0].mxu0
    %433 = vdwg.mxu0
    %434 = vst [vmem:[#allocation2] sm:$0x3] %v431
    // Predicated region
    $region38: #{tpu_custom_call.1} parent=1 // pred_check
      _
    $region39: #{tpu_custom_call.1} parent=1 // pred_check_branch
      %436 = sbr.rel (0) target = $region41
    $region40: #{tpu_custom_call.1} parent=1 // pred_region
      %s438 = ssub.s32 32, 32
      %439 = vsyncadd [#allocation3], %s438
      %s441 = sshll.u32 [#allocation2], 4
      %s442 = int_to_ptr.vmem [resolvable:$true] %s441
      %444 = dma.vmem_to_hbm [thread:$0]  %s442, 32, %s9, [#allocation3]
    $region41: #{tpu_custom_call.1} parent=1 // pred_fallthru
      _
    // Predicated region
    $region42: #{tpu_custom_call.1} parent=1 // pred_check
      _
    $region43: #{tpu_custom_call.1} parent=1 // pred_check_branch
      %446 = sbr.rel (0) target = $region45
    $region44: #{tpu_custom_call.1} parent=1 // pred_region
      %447 = dma.done [#allocation3], 32
    $region45: #{tpu_custom_call.1} parent=1 // pred_fallthru
      _
    %448 = vsyncpa [#allocation3], 1

</llo_original>
